<compile_context>
chip_gen: v5e
topology: v5e:2x2
jax: 0.10.0
libtpu: 0.0.40
codegen_flags: <defaults>
</compile_context>

<pallas_src>
import functools
import math

import numpy as np

import jax
import jax.numpy as jnp
from jax.experimental import pallas as pl
from jax.experimental.pallas import tpu as pltpu


@functools.lru_cache(maxsize=64)
def _bilinear_matrix_np(out_size: int, in_size: int, scale: float,
                        align_corners: bool = False) -> np.ndarray:
    """Dense [out_size, in_size] 1-D bilinear interpolation matrix matching
    PyTorch F.interpolate semantics (recompute_scale_factor=None uses the
    user-provided scale directly). Built with NumPy at trace time and cached,
    so no scatter-add graph is re-emitted per call."""
    dst = np.arange(out_size, dtype=np.float64)
    if align_corners:
        if out_size > 1:
            src = dst * (in_size - 1) / (out_size - 1)
        else:
            src = np.zeros_like(dst)
    else:
        src = (dst + 0.5) / scale - 0.5
        src = np.maximum(src, 0.0)            # PyTorch clamps negative src to 0
    x0 = np.clip(np.floor(src).astype(np.int64), 0, in_size - 1)
    x1 = np.minimum(x0 + 1, in_size - 1)
    lam = src - x0
    w = np.zeros((out_size, in_size), dtype=np.float64)
    rows = np.arange(out_size)
    np.add.at(w, (rows, x0), 1.0 - lam)
    np.add.at(w, (rows, x1), lam)
    return np.ascontiguousarray(w.astype(np.float32))


def _choose_block_planes(nc: int, h: int, w: int, h_out: int, w_out: int,
                         itemsize: int) -> int:
    """Pick how many (n,c) planes to process per grid step."""
    plane_in = h * w * itemsize
    plane_out = h_out * w_out * itemsize
    # Budget for the double-buffered in/out blocks; leaves headroom for the
    # weight matrices and v7x's smaller (64 MiB) physical VMEM.
    budget = 36 * 1024 * 1024
    max_b_vmem = max(1, budget // (2 * (plane_in + plane_out)))
    # ~1 MiB of input per grid step keeps DMAs near the HBM roofline while
    # amortizing the ~0.35 us per-step overhead and the weight reads.
    target = max(1, (1 << 20) // max(plane_in, 1))
    b = int(min(nc, max_b_vmem, target))
    b = max(b, 1)
    # B must evenly divide N*C: take the largest divisor of nc that is <= b.
    while nc % b:
        b -= 1
    # Keep at least 2 grid steps (megacore sharding on v7x, pipeline overlap).
    if nc // b < 2 and nc >= 2:
        b = nc // 2
        while nc % b:
            b -= 1
    return b


def _upscale_kernel(x_ref, wh_ref, wwt_ref, o_ref):
    # x_ref:   (B, H, W)        B image planes (a contiguous slab of (n,c))
    # wh_ref:  (H_out, H)       row (height) interpolation matrix
    # wwt_ref: (W, W_out)       column (width) interpolation matrix, transposed
    # o_ref:   (B, H_out, W_out)
    B, H, W = x_ref.shape
    H_out = wh_ref.shape[0]
    W_out = wwt_ref.shape[1]

    x = x_ref[...].astype(jnp.float32)                       # (B, H, W)

    # Width pass: fuse across the plane batch -> one large-M MXU matmul.
    tmp = jnp.dot(x.reshape(B * H, W), wwt_ref[...],
                  preferred_element_type=jnp.float32)        # (B*H, W_out)
    tmp = tmp.reshape(B, H, W_out)

    # Height pass: contract H with the shared Wh, batched over planes so the
    # result lands directly in (B, H_out, W_out) layout (no 3-D transpose).
    wh_b = jnp.broadcast_to(wh_ref[...], (B, H_out, H))
    out = jax.lax.dot_general(
        wh_b, tmp,
        dimension_numbers=(((2,), (1,)), ((0,), (0,))),
        preferred_element_type=jnp.float32)                  # (B, H_out, W_out)

    o_ref[...] = out.astype(o_ref.dtype)


def upscale(x: jnp.ndarray,
            scale_factor=(2, 2),
            mode: str = "bilinear",
            align_corners: bool = False) -> jnp.ndarray:
    """Pallas TPU equivalent of F.interpolate(x, scale_factor, mode='bilinear')."""
    assert mode == "bilinear", "only bilinear is implemented"
    N, C, H, W = x.shape
    sh, sw = scale_factor
    H_out = int(math.floor(H * sh))
    W_out = int(math.floor(W * sw))

    wh = jnp.asarray(_bilinear_matrix_np(H_out, H, float(sh), align_corners))      # (H_out, H)
    wwt = jnp.asarray(_bilinear_matrix_np(W_out, W, float(sw), align_corners).T)   # (W, W_out)

    NC = N * C
    itemsize = jnp.dtype(x.dtype).itemsize
    B = _choose_block_planes(NC, H, W, H_out, W_out, itemsize)
    num_blocks = NC // B

    x_flat = x.reshape(NC, H, W)

    # Advisory cost hint for XLA scheduling around the custom call.
    flops = 2 * NC * (H * W * W_out + H * H_out * W_out)
    bytes_accessed = (NC * H * W * itemsize
                      + NC * H_out * W_out * itemsize
                      + num_blocks * (int(wh.size) + int(wwt.size)) * 4)

    out_flat = pl.pallas_call(
        _upscale_kernel,
        out_shape=jax.ShapeDtypeStruct((NC, H_out, W_out), x.dtype),
        grid_spec=pltpu.PrefetchScalarGridSpec(
            num_scalar_prefetch=0,
            grid=(num_blocks,),
            in_specs=[
                pl.BlockSpec((B, H, W), lambda i: (i, 0, 0)),
                pl.BlockSpec((H_out, H), lambda i: (0, 0)),
                pl.BlockSpec((W, W_out), lambda i: (0, 0)),
            ],
            out_specs=pl.BlockSpec((B, H_out, W_out), lambda i: (i, 0, 0)),
        ),
        compiler_params=pltpu.CompilerParams(
            dimension_semantics=("parallel",),
            # Above the 16/32 MiB scoped defaults (v5e/v6e), below v7x's 64 MiB
            # physical, so larger B / default double-buffering always fits.
            vmem_limit_bytes=48 * 1024 * 1024,
        ),
        cost_estimate=pl.CostEstimate(
            flops=flops, transcendentals=0, bytes_accessed=bytes_accessed),
    )(x_flat, wh, wwt)

    return out_flat.reshape(N, C, H_out, W_out)


if __name__ == "__main__":
    key = jax.random.PRNGKey(0)
    N, C, H, W = 2, 4, 16, 16
    x = jax.random.normal(key, (N, C, H, W), dtype=jnp.float32)

    out = upscale(x, scale_factor=(2, 2), mode="bilinear", align_corners=False)
    out = jax.block_until_ready(out)

    # Pure-JAX reference using the same separable formulation (sanity check).
    wh_ref = jnp.asarray(_bilinear_matrix_np(2 * H, H, 2.0, False))
    ww_ref = jnp.asarray(_bilinear_matrix_np(2 * W, W, 2.0, False))
    ref = jnp.einsum("oh,nchw,pw->ncop", wh_ref, x, ww_ref)

    assert out.shape == (N, C, 2 * H, 2 * W)
    assert jnp.allclose(out, ref, atol=1e-5, rtol=1e-5)

    print("KERNEL_OK")
</pallas_src>

<mosaic_0001>
module attributes {stable_mosaic.version = 11 : i64} {
  func.func @_upscale_kernel(%arg0: i32, %arg1: memref<4x16x16xf32, #tpu.memory_space<vmem>>, %arg2: memref<32x16xf32, #tpu.memory_space<vmem>>, %arg3: memref<16x32xf32, #tpu.memory_space<vmem>>, %arg4: memref<4x32x32xf32, #tpu.memory_space<vmem>>) attributes {dimension_semantics = [#tpu.dimension_semantics<parallel>], iteration_bounds = array<i64: 2>, scalar_prefetch = 0 : i64, scratch_operands = 0 : i64, tpu.core_type = #tpu.core_type<tc>, window_params = [{transform_indices = @transform_0, window_bounds = array<i64: 4, 16, 16>}, {pipeline_mode = #tpu.pipeline_mode<synchronous>, transform_indices = @transform_1, window_bounds = array<i64: 32, 16>}, {pipeline_mode = #tpu.pipeline_mode<synchronous>, transform_indices = @transform_2, window_bounds = array<i64: 16, 32>}, {transform_indices = @transform_3, window_bounds = array<i64: 4, 32, 32>}]} {
    %c0 = arith.constant 0 : index
    %c0_0 = arith.constant 0 : index
    %c0_1 = arith.constant 0 : index
    %0 = vector.load %arg1[%c0, %c0_0, %c0_1] : memref<4x16x16xf32, #tpu.memory_space<vmem>>, vector<4x16x16xf32>
    %1 = vector.shape_cast %0 : vector<4x16x16xf32> to vector<64x16xf32>
    %c0_2 = arith.constant 0 : index
    %c0_3 = arith.constant 0 : index
    %2 = vector.load %arg3[%c0_2, %c0_3] : memref<16x32xf32, #tpu.memory_space<vmem>>, vector<16x32xf32>
    %cst = arith.constant dense<0.000000e+00> : vector<64x32xf32>
    %3 = tpu.matmul %1, %2, %cst {dimension_numbers = #tpu.dot_dimension_numbers<[1], [0], [0], [1], [0, 0, 1, 1], [], []>} : vector<64x16xf32>, vector<16x32xf32>, vector<64x32xf32> -> vector<64x32xf32>
    %4 = vector.shape_cast %3 : vector<64x32xf32> to vector<4x16x32xf32>
    %c0_4 = arith.constant 0 : index
    %c0_5 = arith.constant 0 : index
    %5 = vector.load %arg2[%c0_4, %c0_5] : memref<32x16xf32, #tpu.memory_space<vmem>>, vector<32x16xf32>
    %6 = vector.shape_cast %5 : vector<32x16xf32> to vector<1x32x16xf32>
    %7 = vector.broadcast %6 : vector<1x32x16xf32> to vector<4x32x16xf32>
    %cst_6 = arith.constant dense<0.000000e+00> : vector<4x32x32xf32>
    %8 = tpu.matmul %7, %4, %cst_6 {dimension_numbers = #tpu.dot_dimension_numbers<[2], [1], [1], [2], [0, 0, 0, 1, 1, 2], [0], [0]>} : vector<4x32x16xf32>, vector<4x16x32xf32>, vector<4x32x32xf32> -> vector<4x32x32xf32>
    %c0_7 = arith.constant 0 : index
    %c0_8 = arith.constant 0 : index
    %c0_9 = arith.constant 0 : index
    %9 = vector.load %arg4[%c0_7, %c0_8, %c0_9] : memref<4x32x32xf32, #tpu.memory_space<vmem>>, vector<4x32x32xf32>
    tpu.vector_store %arg4[%c0_7, %c0_8, %c0_9], %8 {strides = array<i32>} : memref<4x32x32xf32, #tpu.memory_space<vmem>>, vector<4x32x32xf32>,
    return
  }
  func.func @transform_0(%arg0: i32) -> (i32, i32, i32) {
    %c0_i32 = arith.constant 0 : i32
    %c0_i32_0 = arith.constant 0 : i32
    %c0_i32_1 = arith.constant 0 : i32
    return %arg0, %c0_i32, %c0_i32_0 : i32, i32, i32
  }
  func.func @transform_1(%arg0: i32) -> (i32, i32) {
    %c0_i32 = arith.constant 0 : i32
    %c0_i32_0 = arith.constant 0 : i32
    %c0_i32_1 = arith.constant 0 : i32
    return %c0_i32, %c0_i32_0 : i32, i32
  }
  func.func @transform_2(%arg0: i32) -> (i32, i32) {
    %c0_i32 = arith.constant 0 : i32
    %c0_i32_0 = arith.constant 0 : i32
    %c0_i32_1 = arith.constant 0 : i32
    return %c0_i32, %c0_i32_0 : i32, i32
  }
  func.func @transform_3(%arg0: i32) -> (i32, i32, i32) {
    %c0_i32 = arith.constant 0 : i32
    %c0_i32_0 = arith.constant 0 : i32
    %c0_i32_1 = arith.constant 0 : i32
    return %arg0, %c0_i32, %c0_i32_0 : i32, i32, i32
  }
}

</mosaic_0001>

<llo_original>
// kernel: tpu_custom_call.1
$region0: #{tpu_custom_call.1}
  #allocation0 [shape = 'u32[]', space=smem, size = 0x4, offset = 0x4, fixed_abs, tag = 'smem constant byte address 0x4 - core index']
  #allocation1 [shape = 'u32[72,128]{1,0:T(1,128)}', space=vmem, size = 0x9000, scoped, tag = 'internal scratch']
  %s0 = inlined_call_operand.hbm [shape: f32[8,16,16], index: 0, kind: input, shape index: {}]
  %s1 = inlined_call_operand.vmem [shape: f32[32,16], index: 1, kind: input, shape index: {}]
  %s2 = inlined_call_operand.vmem [shape: f32[16,32], index: 2, kind: input, shape index: {}]
  %s3 = inlined_call_operand.hbm [shape: f32[8,32,32], index: 3, kind: output, shape index: {}]
  %s4 = sld [smem:[#allocation0]]
  $region49: #{tpu_custom_call.1} parent=0
    _
  %s6 = ssub.s32 1, %s4
  %s7 = scalar_select 0, %s6, %s4
  $region1: #{tpu_custom_call.1} parent=0
    #allocation2 [shape = 'u8[65536]{0}', space=vmem, size = 0x10000, scoped, tag = 'input window, operand 0']
    #allocation3 [shape = 's32[2]{0}', space=sflag, size = 0x8, scoped, tag = 'scoped memory for tpu_custom_call.1']
    #allocation4 [shape = 's32[2]{0}', space=sflag, size = 0x8, scoped, tag = 'scoped memory for tpu_custom_call.1']
    #allocation5 [shape = 'u8[131072]{0}', space=vmem, size = 0x20000, scoped, tag = 'output window, operand 0']
    %8 = vsyncpa [#allocation3], 0
    %s9 = scalar_lea.sflag [#allocation3], 1
    %10 = vsyncpa %s9, 0
    %11 = vsyncpa [#allocation4], 0
    %s12 = scalar_lea.sflag [#allocation4], 1
    %13 = vsyncpa %s12, 0
    loop: start=0, step=1, limit=4
    $region2: #{tpu_custom_call.1} parent=1 // loop_pre_header
      _
    $region3: #{tpu_custom_call.1} parent=1 // loop_header
      %s15 = sphi 0, %s19
      %p16 = scmp.ge.s32.totalorder %s15, 4
      %s25 = sphi 0, %s27
      %s28 = sphi 0, %s25
      %s29 = sphi 0, %s28
      %s45 = sphi 0, %s29
      %s49 = sphi 0, %s49
      %s51 = sphi 0, %s49
      %s52 = sphi 0, %s51
      %s66 = sphi 0, %s52
      %s70 = sphi 0, %s70
      %s72 = sphi 0, %s70
      %s73 = sphi 0, %s72
      %s87 = sphi 0, %s73
      %s93 = sphi 0, %s95
      %s96 = sphi 0, %s93
      %s97 = sphi 0, %s96
      %s113 = sphi 0, %s97
    $region4: #{tpu_custom_call.1} parent=1 // loop_header_branch
      %18 = sbr.rel (%p16) target = $region8
    $region5: #{tpu_custom_call.1} parent=1 // loop_body
      %s20 = ssub.s32 %s15, 1
      %s21 = ssub.s32 %s15, 2
      %s22 = sadd.s32 %s15, 1
      %s23 = ssub.s32 %s15, %s22
      %p24 = scmp.eq.s32.totalorder %s23, 0
      %s26 = sadd.s32 %s25, 1
      %s27 = scalar_select %p24, %s25, %s26
      %p30 = pneg %p24
      %p31 = scmp.eq.s32.totalorder %s15, 1
      %p32 = por %p30, %p31
      %p33 = scmp.ne.s32.totalorder %s25, %s28
      %p34 = scmp.eq.s32.totalorder %s15, 0
      %p35 = por %p33, %p34
      %p36 = scmp.ne.s32.totalorder %s25, %s28
      %p37 = scmp.eq.s32.totalorder %s20, 1
      %p38 = por %p36, %p37
      %p39 = scmp.ne.s32.totalorder %s28, %s29
      %p40 = scmp.eq.s32.totalorder %s20, 0
      %p41 = por %p39, %p40
      %p42 = scmp.ne.s32.totalorder %s28, %s29
      %p43 = scmp.eq.s32.totalorder %s21, 1
      %p44 = por %p42, %p43
      %p46 = scmp.ne.s32.totalorder %s29, %s45
      %p47 = scmp.eq.s32.totalorder %s21, 0
      %p48 = por %p46, %p47
      %s50 = sadd.s32 %s49, 1
      %p53 = scmp.eq.s32.totalorder %s15, 1
      %p54 = scmp.ne.s32.totalorder %s49, %s51
      %p55 = scmp.eq.s32.totalorder %s15, 0
      %p56 = por %p54, %p55
      %p57 = scmp.ne.s32.totalorder %s49, %s51
      %p58 = scmp.eq.s32.totalorder %s20, 1
      %p59 = por %p57, %p58
      %p60 = scmp.ne.s32.totalorder %s51, %s52
      %p61 = scmp.eq.s32.totalorder %s20, 0
      %p62 = por %p60, %p61
      %p63 = scmp.ne.s32.totalorder %s51, %s52
      %p64 = scmp.eq.s32.totalorder %s21, 1
      %p65 = por %p63, %p64
      %p67 = scmp.ne.s32.totalorder %s52, %s66
      %p68 = scmp.eq.s32.totalorder %s21, 0
      %p69 = por %p67, %p68
      %s71 = sadd.s32 %s70, 1
      %p74 = scmp.eq.s32.totalorder %s15, 1
      %p75 = scmp.ne.s32.totalorder %s70, %s72
      %p76 = scmp.eq.s32.totalorder %s15, 0
      %p77 = por %p75, %p76
      %p78 = scmp.ne.s32.totalorder %s70, %s72
      %p79 = scmp.eq.s32.totalorder %s20, 1
      %p80 = por %p78, %p79
      %p81 = scmp.ne.s32.totalorder %s72, %s73
      %p82 = scmp.eq.s32.totalorder %s20, 0
      %p83 = por %p81, %p82
      %p84 = scmp.ne.s32.totalorder %s72, %s73
      %p85 = scmp.eq.s32.totalorder %s21, 1
      %p86 = por %p84, %p85
      %p88 = scmp.ne.s32.totalorder %s73, %s87
      %p89 = scmp.eq.s32.totalorder %s21, 0
      %p90 = por %p88, %p89
      %s91 = ssub.s32 %s15, %s22
      %p92 = scmp.eq.s32.totalorder %s91, 0
      %s94 = sadd.s32 %s93, 1
      %s95 = scalar_select %p92, %s93, %s94
      %p98 = pneg %p92
      %p99 = scmp.eq.s32.totalorder %s15, 1
      %p100 = por %p98, %p99
      %p101 = scmp.ne.s32.totalorder %s93, %s96
      %p102 = scmp.eq.s32.totalorder %s15, 0
      %p103 = por %p101, %p102
      %p104 = scmp.ne.s32.totalorder %s93, %s96
      %p105 = scmp.eq.s32.totalorder %s20, 1
      %p106 = por %p104, %p105
      %p107 = scmp.ne.s32.totalorder %s96, %s97
      %p108 = scmp.eq.s32.totalorder %s20, 0
      %p109 = por %p107, %p108
      %p110 = scmp.ne.s32.totalorder %s96, %s97
      %p111 = scmp.eq.s32.totalorder %s21, 1
      %p112 = por %p110, %p111
      %p114 = scmp.ne.s32.totalorder %s97, %s113
      %p115 = scmp.eq.s32.totalorder %s21, 0
      %p116 = por %p114, %p115
      %p117 = scmp.le.s32.totalorder 1, %s15
      %p118 = scmp.lt.s32.totalorder %s15, 3
      %p119 = pnand %p117, %p118
      %p120 = pneg %p119
      // Predicated region
      $region9: #{tpu_custom_call.1} parent=5 // pred_check
        _
      $region10: #{tpu_custom_call.1} parent=5 // pred_check_branch
        %122 = sbr.rel (%p119) target = $region12
      $region11: #{tpu_custom_call.1} parent=5 // pred_region
        %s123 = ssub.s32 %s15, 1
        // Predicated region
        $region13: #{tpu_custom_call.1} parent=11 // pred_check
          %p124 = pneg %p62
        $region14: #{tpu_custom_call.1} parent=11 // pred_check_branch
          %126 = sbr.rel (%p124) target = $region16
        $region15: #{tpu_custom_call.1} parent=11 // pred_region
          _
        $region16: #{tpu_custom_call.1} parent=11 // pred_fallthru
          _
        // Predicated region
        $region17: #{tpu_custom_call.1} parent=11 // pred_check
          %p127 = pneg %p83
        $region18: #{tpu_custom_call.1} parent=11 // pred_check_branch
          %129 = sbr.rel (%p127) target = $region20
        $region19: #{tpu_custom_call.1} parent=11 // pred_region
          _
        $region20: #{tpu_custom_call.1} parent=11 // pred_fallthru
          _
      $region12: #{tpu_custom_call.1} parent=5 // pred_fallthru
        _
      %p130 = scmp.lt.s32.totalorder %s15, 2
      // Predicated region
      $region21: #{tpu_custom_call.1} parent=5 // pred_check
        %p131 = pneg %p130
      $region22: #{tpu_custom_call.1} parent=5 // pred_check_branch
        %133 = sbr.rel (%p131) target = $region24
      $region23: #{tpu_custom_call.1} parent=5 // pred_region
        // Predicated region
        $region25: #{tpu_custom_call.1} parent=23 // pred_check
          %p134 = pneg %p35
        $region26: #{tpu_custom_call.1} parent=23 // pred_check_branch
          %136 = sbr.rel (%p134) target = $region28
        $region27: #{tpu_custom_call.1} parent=23 // pred_region
          %s137 = sand.u32 %s25, 1
          %s138 = scalar_lea.sflag [#allocation3], %s137
          %s139 = sand.u32 %s25, 1
          %s140 = smul.addr %s139, 64
          %s141 = scalar_lea.vmem [#allocation2], %s140
          %s142 = smul.u32 4, %s15
          %144 = vsyncadd %s138, 0
          %s145 = smul.addr %s142, 2
          %s146 = smul.addr %s145, 8
          %s147 = scalar_lea.hbm %s0, %s146
          %s148 = sshll.u32 %s147, 4
          %s149 = int_to_ptr.hbm [resolvable:$true] %s148
          %s150 = sshll.u32 %s141, 4
          %s151 = int_to_ptr.vmem [resolvable:$true] %s150
          %156 = dma.hbm_to_vmem [thread:$0]  %s149, 1024, %s151, %s138, 128, 128, 8
        $region28: #{tpu_custom_call.1} parent=23 // pred_fallthru
          _
      $region24: #{tpu_custom_call.1} parent=5 // pred_fallthru
        _
      %p157 = scmp.le.s32.totalorder 1, %s15
      %p158 = scmp.lt.s32.totalorder %s15, 3
      %p159 = pnand %p157, %p158
      %p160 = pneg %p159
      // Predicated region
      $region29: #{tpu_custom_call.1} parent=5 // pred_check
        _
      $region30: #{tpu_custom_call.1} parent=5 // pred_check_branch
        %162 = sbr.rel (%p159) target = $region32
      $region31: #{tpu_custom_call.1} parent=5 // pred_region
        %s163 = ssub.s32 %s15, 1
        %s164 = sand.u32 %s28, 1
        %s165 = scalar_lea.sflag [#allocation3], %s164
        %s166 = sand.u32 %s28, 1
        %s167 = smul.addr %s166, 64
        %s168 = scalar_lea.vmem [#allocation2], %s167
        // Predicated region
        $region33: #{tpu_custom_call.1} parent=31 // pred_check
          %p169 = pneg %p41
        $region34: #{tpu_custom_call.1} parent=31 // pred_check_branch
          %171 = sbr.rel (%p169) target = $region36
        $region35: #{tpu_custom_call.1} parent=31 // pred_region
          %173 = dma.done %s165, 1024
        $region36: #{tpu_custom_call.1} parent=31 // pred_fallthru
          _
        %s174 = sand.u32 %s28, 1
        %s175 = scalar_lea.sflag [#allocation3], %s174
        %s176 = sand.u32 %s28, 1
        %s177 = smul.addr %s176, 64
        %s178 = scalar_lea.vmem [#allocation2], %s177
        %p179 = pneg %p41
        %p180 = pneg %p38
        %p181 = pneg %p62
        %p182 = pneg %p59
        %p183 = pneg %p83
        %p184 = pneg %p80
        %p185 = pneg %p109
        %p186 = pneg %p106
        %s187 = sand.u32 %s96, 1
        %s188 = scalar_lea.sflag [#allocation4], %s187
        %s189 = sand.u32 %s96, 1
        %s190 = smul.addr %s189, 128
        %s191 = scalar_lea.vmem [#allocation5], %s190
        %s192 = smul.u32 4, %s20
        %s193 = smul.u32 4, %s20
        %v194 = vld [vmem:[%s168] sm:$0xff]
        %v195 = vld [vmem:[%s168 + $0x8] sm:$0xff]
        %v196 = vld [vmem:[%s168 + $0x10] sm:$0xff]
        %v197 = vld [vmem:[%s168 + $0x18] sm:$0xff]
        %v198 = vld [vmem:[%s168 + $0x20] sm:$0xff]
        %v199 = vld [vmem:[%s168 + $0x28] sm:$0xff]
        %v200 = vld [vmem:[%s168 + $0x30] sm:$0xff]
        %v201 = vld [vmem:[%s168 + $0x38] sm:$0xff]
        %v202 = vld [vmem:[%s2] sm:$0xff]
        %v203 = vld [vmem:[%s2 + $0x8] sm:$0xff]
        %vm204 = vcmask 130048
        %v206 = vsel %vm204, %v194, 0
        %v209 = vsel %vm204, %v195, 0
        %v212 = vsel %vm204, %v196, 0
        %v215 = vsel %vm204, %v197, 0
        %v218 = vsel %vm204, %v198, 0
        %v221 = vsel %vm204, %v199, 0
        %v224 = vsel %vm204, %v200, 0
        %v227 = vsel %vm204, %v201, 0
        %229 = vmatpush.msra.mxu0 0.0
        %230 = vmatpush.msra.mxu0 0.0
        %231 = vmatpush.msra.mxu0 0.0
        %232 = vmatpush.msra.mxu0 0.0
        %233 = vmatpush.msra.mxu0 0.0
        %234 = vmatpush.msra.mxu0 0.0
        %235 = vmatpush.msra.mxu0 0.0
        %236 = vmatpush.msra.mxu0 0.0
        %237 = vmatpush.msra.mxu0 0.0
        %238 = vmatpush.msra.mxu0 0.0
        %239 = vmatpush.msra.mxu0 0.0
        %240 = vmatpush.msra.mxu0 0.0
        %241 = vmatpush.msra.mxu0 0.0
        %242 = vmatpush.msra.mxu0 0.0
        %243 = vmatpush.msra.mxu0 %v203
        %244 = vmatpush.msra.mxu0 %v202
        %245 = vmatmul.f32.gmra.mxu0 %v206
        %v246 = vpop.f32.mrf.mxu0
        %v247 = vadd.f32 0.0, %v246
        %248 = vmatmul.f32.gmra.mxu0 %v209
        %v249 = vpop.f32.mrf.mxu0
        %v250 = vadd.f32 0.0, %v249
        %251 = vmatmul.f32.gmra.mxu0 %v212
        %v252 = vpop.f32.mrf.mxu0
        %v253 = vadd.f32 0.0, %v252
        %254 = vmatmul.f32.gmra.mxu0 %v215
        %v255 = vpop.f32.mrf.mxu0
        %v256 = vadd.f32 0.0, %v255
        %257 = vmatmul.f32.gmra.mxu0 %v218
        %v258 = vpop.f32.mrf.mxu0
        %v259 = vadd.f32 0.0, %v258
        %260 = vmatmul.f32.gmra.mxu0 %v221
        %v261 = vpop.f32.mrf.mxu0
        %v262 = vadd.f32 0.0, %v261
        %263 = vmatmul.f32.gmra.mxu0 %v224
        %v264 = vpop.f32.mrf.mxu0
        %v265 = vadd.f32 0.0, %v264
        %266 = vmatmul.f32.gmra.mxu0 %v227
        %v267 = vpop.f32.mrf.mxu0
        %v268 = vadd.f32 0.0, %v267
        %269 = vdwg.mxu0
        %v270 = vld [vmem:[%s1] sm:$0xff]
        %v271 = vld [vmem:[%s1 + $0x8] sm:$0xff]
        %v272 = vld [vmem:[%s1 + $0x10] sm:$0xff]
        %v273 = vld [vmem:[%s1 + $0x18] sm:$0xff]
        %v275 = vsel %vm204, %v270, 0
        %v278 = vsel %vm204, %v271, 0
        %v281 = vsel %vm204, %v272, 0
        %v284 = vsel %vm204, %v273, 0
        %286 = vmatpush.msra.mxu0 0.0
        %287 = vmatpush.msra.mxu0 0.0
        %288 = vmatpush.msra.mxu0 0.0
        %289 = vmatpush.msra.mxu0 0.0
        %290 = vmatpush.msra.mxu0 0.0
        %291 = vmatpush.msra.mxu0 0.0
        %292 = vmatpush.msra.mxu0 0.0
        %293 = vmatpush.msra.mxu0 0.0
        %294 = vmatpush.msra.mxu0 0.0
        %295 = vmatpush.msra.mxu0 0.0
        %296 = vmatpush.msra.mxu0 0.0
        %297 = vmatpush.msra.mxu0 0.0
        %298 = vmatpush.msra.mxu0 0.0
        %299 = vmatpush.msra.mxu0 0.0
        %300 = vmatpush.msra.mxu0 %v250
        %301 = vmatpush.msra.mxu0 %v247
        %302 = vmatmul.f32.gmra.mxu0 %v275
        %v303 = vpop.f32.mrf.mxu0
        %v304 = vadd.f32 0.0, %v303
        %305 = vmatmul.f32.gmra.mxu0 %v278
        %v306 = vpop.f32.mrf.mxu0
        %v307 = vadd.f32 0.0, %v306
        %308 = vmatmul.f32.gmra.mxu0 %v281
        %v309 = vpop.f32.mrf.mxu0
        %v310 = vadd.f32 0.0, %v309
        %311 = vmatmul.f32.gmra.mxu0 %v284
        %v312 = vpop.f32.mrf.mxu0
        %v313 = vadd.f32 0.0, %v312
        %314 = vdwg.mxu0
        %315 = vmatpush.msra.mxu0 0.0
        %316 = vmatpush.msra.mxu0 0.0
        %317 = vmatpush.msra.mxu0 0.0
        %318 = vmatpush.msra.mxu0 0.0
        %319 = vmatpush.msra.mxu0 0.0
        %320 = vmatpush.msra.mxu0 0.0
        %321 = vmatpush.msra.mxu0 0.0
        %322 = vmatpush.msra.mxu0 0.0
        %323 = vmatpush.msra.mxu0 0.0
        %324 = vmatpush.msra.mxu0 0.0
        %325 = vmatpush.msra.mxu0 0.0
        %326 = vmatpush.msra.mxu0 0.0
        %327 = vmatpush.msra.mxu0 0.0
        %328 = vmatpush.msra.mxu0 0.0
        %329 = vmatpush.msra.mxu0 %v256
        %330 = vmatpush.msra.mxu0 %v253
        %331 = vmatmul.f32.gmra.mxu0 %v275
        %v332 = vpop.f32.mrf.mxu0
        %v333 = vadd.f32 0.0, %v332
        %334 = vmatmul.f32.gmra.mxu0 %v278
        %v335 = vpop.f32.mrf.mxu0
        %v336 = vadd.f32 0.0, %v335
        %337 = vmatmul.f32.gmra.mxu0 %v281
        %v338 = vpop.f32.mrf.mxu0
        %v339 = vadd.f32 0.0, %v338
        %340 = vmatmul.f32.gmra.mxu0 %v284
        %v341 = vpop.f32.mrf.mxu0
        %v342 = vadd.f32 0.0, %v341
        %343 = vdwg.mxu0
        %344 = vmatpush.msra.mxu0 0.0
        %345 = vmatpush.msra.mxu0 0.0
        %346 = vmatpush.msra.mxu0 0.0
        %347 = vmatpush.msra.mxu0 0.0
        %348 = vmatpush.msra.mxu0 0.0
        %349 = vmatpush.msra.mxu0 0.0
        %350 = vmatpush.msra.mxu0 0.0
        %351 = vmatpush.msra.mxu0 0.0
        %352 = vmatpush.msra.mxu0 0.0
        %353 = vmatpush.msra.mxu0 0.0
        %354 = vmatpush.msra.mxu0 0.0
        %355 = vmatpush.msra.mxu0 0.0
        %356 = vmatpush.msra.mxu0 0.0
        %357 = vmatpush.msra.mxu0 0.0
        %358 = vmatpush.msra.mxu0 %v262
        %359 = vmatpush.msra.mxu0 %v259
        %360 = vmatmul.f32.gmra.mxu0 %v275
        %v361 = vpop.f32.mrf.mxu0
        %v362 = vadd.f32 0.0, %v361
        %363 = vmatmul.f32.gmra.mxu0 %v278
        %v364 = vpop.f32.mrf.mxu0
        %v365 = vadd.f32 0.0, %v364
        %366 = vmatmul.f32.gmra.mxu0 %v281
        %v367 = vpop.f32.mrf.mxu0
        %v368 = vadd.f32 0.0, %v367
        %369 = vmatmul.f32.gmra.mxu0 %v284
        %v370 = vpop.f32.mrf.mxu0
        %v371 = vadd.f32 0.0, %v370
        %372 = vdwg.mxu0
        %373 = vmatpush.msra.mxu0 0.0
        %374 = vmatpush.msra.mxu0 0.0
        %375 = vmatpush.msra.mxu0 0.0
        %376 = vmatpush.msra.mxu0 0.0
        %377 = vmatpush.msra.mxu0 0.0
        %378 = vmatpush.msra.mxu0 0.0
        %379 = vmatpush.msra.mxu0 0.0
        %380 = vmatpush.msra.mxu0 0.0
        %381 = vmatpush.msra.mxu0 0.0
        %382 = vmatpush.msra.mxu0 0.0
        %383 = vmatpush.msra.mxu0 0.0
        %384 = vmatpush.msra.mxu0 0.0
        %385 = vmatpush.msra.mxu0 0.0
        %386 = vmatpush.msra.mxu0 0.0
        %387 = vmatpush.msra.mxu0 %v268
        %388 = vmatpush.msra.mxu0 %v265
        %389 = vmatmul.f32.gmra.mxu0 %v275
        %v390 = vpop.f32.mrf.mxu0
        %v391 = vadd.f32 0.0, %v390
        %392 = vmatmul.f32.gmra.mxu0 %v278
        %v393 = vpop.f32.mrf.mxu0
        %v394 = vadd.f32 0.0, %v393
        %395 = vmatmul.f32.gmra.mxu0 %v281
        %v396 = vpop.f32.mrf.mxu0
        %v397 = vadd.f32 0.0, %v396
        %398 = vmatmul.f32.gmra.mxu0 %v284
        %v399 = vpop.f32.mrf.mxu0
        %v400 = vadd.f32 0.0, %v399
        %401 = vdwg.mxu0
        %vm402 = vcmask 261120
        %403 = vst.msk [vmem:[%s191] sm:$0xff] %vm402, %v304
        %404 = vst.msk [vmem:[%s191 + $0x8] sm:$0xff] %vm402, %v307
        %405 = vst.msk [vmem:[%s191 + $0x10] sm:$0xff] %vm402, %v310
        %406 = vst.msk [vmem:[%s191 + $0x18] sm:$0xff] %vm402, %v313
        %407 = vst.msk [vmem:[%s191 + $0x20] sm:$0xff] %vm402, %v333
        %408 = vst.msk [vmem:[%s191 + $0x28] sm:$0xff] %vm402, %v336
        %409 = vst.msk [vmem:[%s191 + $0x30] sm:$0xff] %vm402, %v339
        %410 = vst.msk [vmem:[%s191 + $0x38] sm:$0xff] %vm402, %v342
        %411 = vst.msk [vmem:[%s191 + $0x40] sm:$0xff] %vm402, %v362
        %412 = vst.msk [vmem:[%s191 + $0x48] sm:$0xff] %vm402, %v365
        %413 = vst.msk [vmem:[%s191 + $0x50] sm:$0xff] %vm402, %v368
        %414 = vst.msk [vmem:[%s191 + $0x58] sm:$0xff] %vm402, %v371
        %415 = vst.msk [vmem:[%s191 + $0x60] sm:$0xff] %vm402, %v391
        %416 = vst.msk [vmem:[%s191 + $0x68] sm:$0xff] %vm402, %v394
        %417 = vst.msk [vmem:[%s191 + $0x70] sm:$0xff] %vm402, %v397
        %418 = vst.msk [vmem:[%s191 + $0x78] sm:$0xff] %vm402, %v400
        %s419 = sand.u32 %s96, 1
        %s420 = scalar_lea.sflag [#allocation4], %s419
        %s421 = sand.u32 %s96, 1
        %s422 = smul.addr %s421, 128
        %s423 = scalar_lea.vmem [#allocation5], %s422
        // Predicated region
        $region37: #{tpu_custom_call.1} parent=31 // pred_check
          %p424 = pneg %p106
        $region38: #{tpu_custom_call.1} parent=31 // pred_check_branch
          %426 = sbr.rel (%p424) target = $region40
        $region39: #{tpu_custom_call.1} parent=31 // pred_region
          %s427 = smul.u32 4, %s20
          %429 = vsyncadd %s420, 0
          %s430 = smul.addr %s427, 4
          %s431 = smul.addr %s430, 8
          %s432 = scalar_lea.hbm %s3, %s431
          %s433 = sshll.u32 %s423, 4
          %s434 = int_to_ptr.vmem [resolvable:$true] %s433
          %s435 = sshll.u32 %s432, 4
          %s436 = int_to_ptr.hbm [resolvable:$true] %s435
          %441 = dma.vmem_to_hbm [thread:$0]  %s434, 2048, %s436, %s420, 128, 128, 8
        $region40: #{tpu_custom_call.1} parent=31 // pred_fallthru
          _
      $region32: #{tpu_custom_call.1} parent=5 // pred_fallthru
        _
      %p442 = scmp.le.s32.totalorder 2, %s15
      // Predicated region
      $region41: #{tpu_custom_call.1} parent=5 // pred_check
        %p443 = pneg %p442
      $region42: #{tpu_custom_call.1} parent=5 // pred_check_branch
        %445 = sbr.rel (%p443) target = $region44
      $region43: #{tpu_custom_call.1} parent=5 // pred_region
        %s446 = ssub.s32 %s15, 2
        // Predicated region
        $region45: #{tpu_custom_call.1} parent=43 // pred_check
          %p447 = pneg %p112
        $region46: #{tpu_custom_call.1} parent=43 // pred_check_branch
          %449 = sbr.rel (%p447) target = $region48
        $region47: #{tpu_custom_call.1} parent=43 // pred_region
          %s450 = sand.u32 %s97, 1
          %s451 = scalar_lea.sflag [#allocation4], %s450
          %s452 = sand.u32 %s97, 1
          %s453 = smul.addr %s452, 128
          %s454 = scalar_lea.vmem [#allocation5], %s453
          %456 = dma.done %s451, 2048
        $region48: #{tpu_custom_call.1} parent=43 // pred_fallthru
          _
      $region44: #{tpu_custom_call.1} parent=5 // pred_fallthru
        _
    $region6: #{tpu_custom_call.1} parent=1 // loop_footer
      %s19 = sadd.s32 1, %s15
    $region7: #{tpu_custom_call.1} parent=1 // loop_footer_branch
      %14 = sbr.rel target = $region3
    $region8: #{tpu_custom_call.1} parent=1 // loop_exit
      _
    %457 = vsyncpa [#allocation3], 1
    %s458 = scalar_lea.sflag [#allocation3], 1
    %459 = vsyncpa %s458, 1
    %460 = vsyncpa [#allocation4], 1
    %s461 = scalar_lea.sflag [#allocation4], 1
    %462 = vsyncpa %s461, 1

</llo_original>
